<compile_context>
chip_gen: v7x
topology: tpu7x:2x2x1
jax: 0.10.0
libtpu: 0.0.40
codegen_flags: <defaults>
</compile_context>

<pallas_src>
import functools

import jax
import jax.numpy as jnp
import numpy as np
from jax import lax
from jax.experimental import pallas as pl
from jax.experimental.pallas import tpu as pltpu

NEG_INF = -10000.0
LANES = 128


def _viterbi_kernel(maxlen_ref, lens_ref, feats_ref, wt_ref,
                    score_ref, path_ref, bp_ref, *, start_idx, end_idx):
    """Batched Viterbi decode for one batch block (batch on the lane axis).

    maxlen_ref: SMEM (NB,)      int32  per-block max sequence length (scalar prefetch)
    lens_ref  : VMEM (1, Bb)    int32  per-lane sequence lengths
    feats_ref : VMEM (T, K, Bb) f32    emissions, [time, tag, batch]
    wt_ref    : VMEM (K, K)     f32    transposed transitions: wt[prev, next]
    score_ref : VMEM (1, Bb)    f32    best terminal path score (out)
    path_ref  : VMEM (T, Bb)    int32  decoded tag sequence, -1 padded (out)
    bp_ref    : VMEM (T, K, Bb) int32  backpointers (scratch; never written to HBM)
    """
    nb = pl.program_id(0)
    T, K, Bb = feats_ref.shape
    max_len = maxlen_ref[nb]

    lens_row = lens_ref[...]                                    # (1, Bb)
    lens_kb = jnp.broadcast_to(lens_row, (K, Bb))               # hoisted, loop-invariant
    iota_kb = lax.broadcasted_iota(jnp.int32, (K, Bb), 0)       # prev-tag index grid

    # Loop-invariant transition columns wt[:, j] = weights[j, :], broadcast along lanes once.
    w_cols = [jnp.broadcast_to(wt_ref[:, j:j + 1], (K, Bb)) for j in range(K)]

    # init forward viterbi vars: 0 at START tag, -10000 elsewhere; layout (prev_tag, batch).
    fv0 = jnp.where(iota_kb == start_idx, 0.0, NEG_INF).astype(jnp.float32)

    def fwd_step(t, fv):
        feat_t = feats_ref[t]                                   # (K, Bb) emissions @ t
        best_rows, bp_rows = [], []
        for j in range(K):                                      # static unroll over next tags
            sj = fv + w_cols[j]                                 # (K, Bb) over prev tags
            bj = jnp.max(sj, axis=0, keepdims=True)             # (1, Bb)
            ij = jnp.min(jnp.where(sj == bj, iota_kb, K),
                         axis=0, keepdims=True)                 # (1, Bb) first-argmax
            best_rows.append(bj)
            bp_rows.append(ij)
        best = jnp.concatenate(best_rows, axis=0)               # (K, Bb)
        bidx = jnp.concatenate(bp_rows, axis=0).astype(jnp.int32)
        bp_ref[t] = bidx
        new_fv = best + feat_t
        return jnp.where(t < lens_kb, new_fv, fv)               # freeze finished lanes

    fv = lax.fori_loop(0, max_len, fwd_step, fv0)

    # terminal_var = forward_var + weights[end_idx]  (transition tag -> END)
    terminal = fv + jnp.broadcast_to(wt_ref[:, end_idx:end_idx + 1], (K, Bb))
    score_row = jnp.max(terminal, axis=0, keepdims=True)        # (1, Bb)
    best_tag = jnp.min(jnp.where(terminal == score_row, iota_kb, K),
                       axis=0, keepdims=True).astype(jnp.int32) # (1, Bb)
    score_ref[...] = score_row

    # In-kernel back-tracking: vectorized per-lane gather over the VMEM backpointer scratch.
    # TODO(synk): the reference's `assert start == start_idx` consistency check has no
    # in-kernel equivalent and is omitted (it does not affect the returned path/score).
    path_ref[...] = jnp.full((T, Bb), -1, dtype=jnp.int32)
    lm1 = lens_row - 1                                          # (1, Bb)

    def bwd_step(i, cur):
        t = max_len - 1 - i
        bp_row = bp_ref[jnp.minimum(t + 1, T - 1)]              # (K, Bb)
        gathered = jnp.sum(jnp.where(iota_kb == cur, bp_row, 0),
                           axis=0, keepdims=True)               # (1, Bb) = bp[t+1][cur]
        out = jnp.where(t == lm1, best_tag,
                        jnp.where(t < lm1, gathered, -1)).astype(jnp.int32)
        path_ref[pl.ds(t, 1), :] = out
        return jnp.where(t <= lm1, out, cur)

    lax.fori_loop(0, max_len, bwd_step, best_tag)


def _round_up(x, m):
    return (x + m - 1) // m * m


@functools.partial(jax.jit, static_argnums=(3, 4))
def crf_viterbi_forward(feats, lens, weights, start_idx, end_idx):
    """Equivalent of CRF.forward: returns (path_scores[B], best_paths[B, T] padded -1)."""
    B, T, K = feats.shape
    lens = lens.astype(jnp.int32)

    if B >= LANES:
        Bb = LANES
        B_pad = _round_up(B, Bb)
    else:
        Bb = B                      # full-extent lane block (any width ok when == array dim)
        B_pad = B
    NB = B_pad // Bb

    feats_p = jnp.pad(feats.astype(jnp.float32), ((0, B_pad - B), (0, 0), (0, 0)))
    lens_p = jnp.pad(lens, ((0, B_pad - B),))

    feats_t = jnp.transpose(feats_p, (1, 2, 0))                  # (T, K, B_pad), batch on lanes
    lens_2d = lens_p.reshape(1, B_pad)
    block_max = jnp.max(lens_p.reshape(NB, Bb), axis=1).astype(jnp.int32)   # (NB,)
    wt = jnp.transpose(weights.astype(jnp.float32))              # wt[prev, next]

    kernel = functools.partial(_viterbi_kernel, start_idx=start_idx, end_idx=end_idx)

    score, path = pl.pallas_call(
        kernel,
        out_shape=(jax.ShapeDtypeStruct((1, B_pad), jnp.float32),
                   jax.ShapeDtypeStruct((T, B_pad), jnp.int32)),
        grid_spec=pltpu.PrefetchScalarGridSpec(
            num_scalar_prefetch=1,
            grid=(NB,),
            in_specs=[pl.BlockSpec((1, Bb), lambda nb, ml: (0, nb)),
                      pl.BlockSpec((T, K, Bb), lambda nb, ml: (0, 0, nb)),
                      pl.BlockSpec((K, K), lambda nb, ml: (0, 0))],
            out_specs=(pl.BlockSpec((1, Bb), lambda nb, ml: (0, nb)),
                       pl.BlockSpec((T, Bb), lambda nb, ml: (0, nb))),
            scratch_shapes=[pltpu.VMEM((T, K, Bb), jnp.int32)]),
        compiler_params=pltpu.CompilerParams(
            dimension_semantics=("parallel",)),
    )(block_max, lens_2d, feats_t, wt)

    path_scores = score[0, :B]
    best_paths = jnp.transpose(path)[:B]                         # (B, T), -1 padded
    return path_scores, best_paths


def _viterbi_ref(feat, w, l, start_idx, end_idx):
    """Pure-numpy reference mirroring CRF._viterbi_decode."""
    K = w.shape[0]
    fv = np.full((K,), NEG_INF, dtype=np.float32)
    fv[start_idx] = 0.0
    bps = []
    for t in range(l):
        scores = fv[None, :] + w            # [next, prev]
        best = scores.max(axis=1)
        bidx = scores.argmax(axis=1)
        fv = (best + feat[t]).astype(np.float32)
        bps.append(bidx)
    terminal = fv + w[end_idx]
    best_tag = int(terminal.argmax())
    path_score = float(terminal.max())
    path = [best_tag]
    for bp in reversed(bps):
        best_tag = int(bp[best_tag])
        path.append(best_tag)
    start = path.pop()
    assert start == start_idx
    path.reverse()
    return path_score, path


if __name__ == "__main__":
    B, T, K = 3, 8, 8
    start_idx, end_idx = 6, 7

    key = jax.random.PRNGKey(0)
    k_w, k_f = jax.random.split(key)

    # Deterministic parameter init, mirroring CRF.reset_parameters():
    # uniform(-1/K, 1/K) minus 10000 * adjacency  (adjacency forbids -> START and END ->).
    weights = jax.random.uniform(k_w, (K, K), jnp.float32,
                                 minval=-1.0 / K, maxval=1.0 / K)
    adjacency = jnp.zeros((K, K), jnp.float32)
    adjacency = adjacency.at[start_idx, :].set(1.0)
    adjacency = adjacency.at[:, end_idx].set(1.0)
    weights = weights - 10000.0 * adjacency

    feats = jax.random.normal(k_f, (B, T, K), jnp.float32)
    lens = jnp.array([T, 5, 1], jnp.int32)

    scores, paths = crf_viterbi_forward(feats, lens, weights, start_idx, end_idx)
    jax.block_until_ready((scores, paths))

    # Correctness check against the numpy reference.
    w_np = np.asarray(weights)
    feats_np = np.asarray(feats)
    lens_np = np.asarray(lens)
    scores_np = np.asarray(scores)
    paths_np = np.asarray(paths)
    for b in range(B):
        l = int(lens_np[b])
        ref_score, ref_path = _viterbi_ref(feats_np[b], w_np, l, start_idx, end_idx)
        assert np.allclose(scores_np[b], ref_score, atol=1e-2, rtol=1e-5), \
            (b, float(scores_np[b]), ref_score)
        assert list(paths_np[b, :l]) == ref_path, (b, list(paths_np[b, :l]), ref_path)
        assert all(int(x) == -1 for x in paths_np[b, l:]), (b, list(paths_np[b, l:]))

    print("KERNEL_OK")
</pallas_src>

<mosaic_0001>
module attributes {stable_mosaic.version = 11 : i64} {
  func.func @_viterbi_kernel(%arg0: i32, %arg1: memref<1xi32, #tpu.memory_space<smem>>, %arg2: memref<1x3xi32, #tpu.memory_space<vmem>>, %arg3: memref<8x8x3xf32, #tpu.memory_space<vmem>>, %arg4: memref<8x8xf32, #tpu.memory_space<vmem>>, %arg5: memref<1x3xf32, #tpu.memory_space<vmem>>, %arg6: memref<8x3xi32, #tpu.memory_space<vmem>>, %arg7: memref<8x8x3xi32, #tpu.memory_space<vmem>>) attributes {dimension_semantics = [#tpu.dimension_semantics<parallel>], iteration_bounds = array<i64: 1>, scalar_prefetch = 1 : i64, scratch_operands = 1 : i64, tpu.core_type = #tpu.core_type<tc>, window_params = [{transform_indices = @transform_0, window_bounds = array<i64: 1, 3>}, {transform_indices = @transform_1, window_bounds = array<i64: 8, 8, 3>}, {pipeline_mode = #tpu.pipeline_mode<synchronous>, transform_indices = @transform_2, window_bounds = array<i64: 8, 8>}, {transform_indices = @transform_3, window_bounds = array<i64: 1, 3>}, {transform_indices = @transform_4, window_bounds = array<i64: 8, 3>}]} {
    %0 = arith.index_cast %arg0 : i32 to index
    %1 = memref.load %arg1[%0] : memref<1xi32, #tpu.memory_space<smem>>
    %c0 = arith.constant 0 : index
    %c0_0 = arith.constant 0 : index
    %2 = vector.load %arg2[%c0, %c0_0] : memref<1x3xi32, #tpu.memory_space<vmem>>, vector<1x3xi32>
    %3 = vector.shape_cast %2 : vector<1x3xi32> to vector<1x3xi32>
    %4 = vector.broadcast %3 : vector<1x3xi32> to vector<8x3xi32>
    %5 = tpu.iota {dimensions = array<i32: 0>} : vector<8x3xi32>
    %c0_1 = arith.constant 0 : index
    %c0_2 = arith.constant 0 : index
    %6 = vector.load %arg4[%c0_1, %c0_2] : memref<8x8xf32, #tpu.memory_space<vmem>>, vector<8x1xf32>
    %7 = vector.shape_cast %6 : vector<8x1xf32> to vector<8x1xf32>
    %8 = vector.broadcast %7 : vector<8x1xf32> to vector<8x3xf32>
    %c0_3 = arith.constant 0 : index
    %c1 = arith.constant 1 : index
    %9 = vector.load %arg4[%c0_3, %c1] : memref<8x8xf32, #tpu.memory_space<vmem>>, vector<8x1xf32>
    %10 = vector.shape_cast %9 : vector<8x1xf32> to vector<8x1xf32>
    %11 = vector.broadcast %10 : vector<8x1xf32> to vector<8x3xf32>
    %c0_4 = arith.constant 0 : index
    %c2 = arith.constant 2 : index
    %12 = vector.load %arg4[%c0_4, %c2] : memref<8x8xf32, #tpu.memory_space<vmem>>, vector<8x1xf32>
    %13 = vector.shape_cast %12 : vector<8x1xf32> to vector<8x1xf32>
    %14 = vector.broadcast %13 : vector<8x1xf32> to vector<8x3xf32>
    %c0_5 = arith.constant 0 : index
    %c3 = arith.constant 3 : index
    %15 = vector.load %arg4[%c0_5, %c3] : memref<8x8xf32, #tpu.memory_space<vmem>>, vector<8x1xf32>
    %16 = vector.shape_cast %15 : vector<8x1xf32> to vector<8x1xf32>
    %17 = vector.broadcast %16 : vector<8x1xf32> to vector<8x3xf32>
    %c0_6 = arith.constant 0 : index
    %c4 = arith.constant 4 : index
    %18 = vector.load %arg4[%c0_6, %c4] : memref<8x8xf32, #tpu.memory_space<vmem>>, vector<8x1xf32>
    %19 = vector.shape_cast %18 : vector<8x1xf32> to vector<8x1xf32>
    %20 = vector.broadcast %19 : vector<8x1xf32> to vector<8x3xf32>
    %c0_7 = arith.constant 0 : index
    %c5 = arith.constant 5 : index
    %21 = vector.load %arg4[%c0_7, %c5] : memref<8x8xf32, #tpu.memory_space<vmem>>, vector<8x1xf32>
    %22 = vector.shape_cast %21 : vector<8x1xf32> to vector<8x1xf32>
    %23 = vector.broadcast %22 : vector<8x1xf32> to vector<8x3xf32>
    %c0_8 = arith.constant 0 : index
    %c6 = arith.constant 6 : index
    %24 = vector.load %arg4[%c0_8, %c6] : memref<8x8xf32, #tpu.memory_space<vmem>>, vector<8x1xf32>
    %25 = vector.shape_cast %24 : vector<8x1xf32> to vector<8x1xf32>
    %26 = vector.broadcast %25 : vector<8x1xf32> to vector<8x3xf32>
    %c0_9 = arith.constant 0 : index
    %c7 = arith.constant 7 : index
    %27 = vector.load %arg4[%c0_9, %c7] : memref<8x8xf32, #tpu.memory_space<vmem>>, vector<8x1xf32>
    %28 = vector.shape_cast %27 : vector<8x1xf32> to vector<8x1xf32>
    %29 = vector.broadcast %28 : vector<8x1xf32> to vector<8x3xf32>
    %c6_i32 = arith.constant 6 : i32
    %30 = vector.broadcast %c6_i32 : i32 to vector<8x3xi32>
    %31 = arith.cmpi eq, %5, %30 : vector<8x3xi32>
    %cst = arith.constant 0.000000e+00 : f32
    %cst_10 = arith.constant -1.000000e+04 : f32
    %32 = vector.broadcast %cst : f32 to vector<8x3xf32>
    %33 = vector.broadcast %cst_10 : f32 to vector<8x3xf32>
    %34 = arith.select %31, %32, %33 : vector<8x3xi1>, vector<8x3xf32>
    %c0_i32 = arith.constant 0 : i32
    %35 = arith.subi %1, %c0_i32 : i32
    %36 = arith.addi %c0_i32, %35 : i32
    %c1_i32 = arith.constant 1 : i32
    %37 = scf.for %arg8 = %c0_i32 to %36 step %c1_i32 iter_args(%arg9 = %34) -> (vector<8x3xf32>)  : i32 {
      %58 = arith.index_cast %arg8 : i32 to index
      %c0_22 = arith.constant 0 : index
      %c0_23 = arith.constant 0 : index
      %59 = vector.load %arg3[%58, %c0_22, %c0_23] : memref<8x8x3xf32, #tpu.memory_space<vmem>>, vector<1x8x3xf32>
      %60 = vector.shape_cast %59 : vector<1x8x3xf32> to vector<8x3xf32>
      %61 = arith.addf %arg9, %8 : vector<8x3xf32>
      %cst_24 = arith.constant dense<0xFF800000> : vector<3xf32>
      %62 = vector.multi_reduction <maximumf>, %61, %cst_24 [0] : vector<8x3xf32> to vector<3xf32>
      %63 = vector.shape_cast %62 : vector<3xf32> to vector<1x3xf32>
      %64 = vector.broadcast %63 : vector<1x3xf32> to vector<8x3xf32>
      %65 = arith.cmpf oeq, %61, %64 : vector<8x3xf32>
      %c8_i32_25 = arith.constant 8 : i32
      %66 = vector.broadcast %c8_i32_25 : i32 to vector<8x3xi32>
      %67 = arith.select %65, %5, %66 : vector<8x3xi1>, vector<8x3xi32>
      %cst_26 = arith.constant dense<2147483647> : vector<3xi32>
      %68 = vector.multi_reduction <minsi>, %67, %cst_26 [0] : vector<8x3xi32> to vector<3xi32>
      %69 = vector.shape_cast %68 : vector<3xi32> to vector<1x3xi32>
      %70 = arith.addf %arg9, %11 : vector<8x3xf32>
      %cst_27 = arith.constant dense<0xFF800000> : vector<3xf32>
      %71 = vector.multi_reduction <maximumf>, %70, %cst_27 [0] : vector<8x3xf32> to vector<3xf32>
      %72 = vector.shape_cast %71 : vector<3xf32> to vector<1x3xf32>
      %73 = vector.broadcast %72 : vector<1x3xf32> to vector<8x3xf32>
      %74 = arith.cmpf oeq, %70, %73 : vector<8x3xf32>
      %c8_i32_28 = arith.constant 8 : i32
      %75 = vector.broadcast %c8_i32_28 : i32 to vector<8x3xi32>
      %76 = arith.select %74, %5, %75 : vector<8x3xi1>, vector<8x3xi32>
      %cst_29 = arith.constant dense<2147483647> : vector<3xi32>
      %77 = vector.multi_reduction <minsi>, %76, %cst_29 [0] : vector<8x3xi32> to vector<3xi32>
      %78 = vector.shape_cast %77 : vector<3xi32> to vector<1x3xi32>
      %79 = arith.addf %arg9, %14 : vector<8x3xf32>
      %cst_30 = arith.constant dense<0xFF800000> : vector<3xf32>
      %80 = vector.multi_reduction <maximumf>, %79, %cst_30 [0] : vector<8x3xf32> to vector<3xf32>
      %81 = vector.shape_cast %80 : vector<3xf32> to vector<1x3xf32>
      %82 = vector.broadcast %81 : vector<1x3xf32> to vector<8x3xf32>
      %83 = arith.cmpf oeq, %79, %82 : vector<8x3xf32>
      %c8_i32_31 = arith.constant 8 : i32
      %84 = vector.broadcast %c8_i32_31 : i32 to vector<8x3xi32>
      %85 = arith.select %83, %5, %84 : vector<8x3xi1>, vector<8x3xi32>
      %cst_32 = arith.constant dense<2147483647> : vector<3xi32>
      %86 = vector.multi_reduction <minsi>, %85, %cst_32 [0] : vector<8x3xi32> to vector<3xi32>
      %87 = vector.shape_cast %86 : vector<3xi32> to vector<1x3xi32>
      %88 = arith.addf %arg9, %17 : vector<8x3xf32>
      %cst_33 = arith.constant dense<0xFF800000> : vector<3xf32>
      %89 = vector.multi_reduction <maximumf>, %88, %cst_33 [0] : vector<8x3xf32> to vector<3xf32>
      %90 = vector.shape_cast %89 : vector<3xf32> to vector<1x3xf32>
      %91 = vector.broadcast %90 : vector<1x3xf32> to vector<8x3xf32>
      %92 = arith.cmpf oeq, %88, %91 : vector<8x3xf32>
      %c8_i32_34 = arith.constant 8 : i32
      %93 = vector.broadcast %c8_i32_34 : i32 to vector<8x3xi32>
      %94 = arith.select %92, %5, %93 : vector<8x3xi1>, vector<8x3xi32>
      %cst_35 = arith.constant dense<2147483647> : vector<3xi32>
      %95 = vector.multi_reduction <minsi>, %94, %cst_35 [0] : vector<8x3xi32> to vector<3xi32>
      %96 = vector.shape_cast %95 : vector<3xi32> to vector<1x3xi32>
      %97 = arith.addf %arg9, %20 : vector<8x3xf32>
      %cst_36 = arith.constant dense<0xFF800000> : vector<3xf32>
      %98 = vector.multi_reduction <maximumf>, %97, %cst_36 [0] : vector<8x3xf32> to vector<3xf32>
      %99 = vector.shape_cast %98 : vector<3xf32> to vector<1x3xf32>
      %100 = vector.broadcast %99 : vector<1x3xf32> to vector<8x3xf32>
      %101 = arith.cmpf oeq, %97, %100 : vector<8x3xf32>
      %c8_i32_37 = arith.constant 8 : i32
      %102 = vector.broadcast %c8_i32_37 : i32 to vector<8x3xi32>
      %103 = arith.select %101, %5, %102 : vector<8x3xi1>, vector<8x3xi32>
      %cst_38 = arith.constant dense<2147483647> : vector<3xi32>
      %104 = vector.multi_reduction <minsi>, %103, %cst_38 [0] : vector<8x3xi32> to vector<3xi32>
      %105 = vector.shape_cast %104 : vector<3xi32> to vector<1x3xi32>
      %106 = arith.addf %arg9, %23 : vector<8x3xf32>
      %cst_39 = arith.constant dense<0xFF800000> : vector<3xf32>
      %107 = vector.multi_reduction <maximumf>, %106, %cst_39 [0] : vector<8x3xf32> to vector<3xf32>
      %108 = vector.shape_cast %107 : vector<3xf32> to vector<1x3xf32>
      %109 = vector.broadcast %108 : vector<1x3xf32> to vector<8x3xf32>
      %110 = arith.cmpf oeq, %106, %109 : vector<8x3xf32>
      %c8_i32_40 = arith.constant 8 : i32
      %111 = vector.broadcast %c8_i32_40 : i32 to vector<8x3xi32>
      %112 = arith.select %110, %5, %111 : vector<8x3xi1>, vector<8x3xi32>
      %cst_41 = arith.constant dense<2147483647> : vector<3xi32>
      %113 = vector.multi_reduction <minsi>, %112, %cst_41 [0] : vector<8x3xi32> to vector<3xi32>
      %114 = vector.shape_cast %113 : vector<3xi32> to vector<1x3xi32>
      %115 = arith.addf %arg9, %26 : vector<8x3xf32>
      %cst_42 = arith.constant dense<0xFF800000> : vector<3xf32>
      %116 = vector.multi_reduction <maximumf>, %115, %cst_42 [0] : vector<8x3xf32> to vector<3xf32>
      %117 = vector.shape_cast %116 : vector<3xf32> to vector<1x3xf32>
      %118 = vector.broadcast %117 : vector<1x3xf32> to vector<8x3xf32>
      %119 = arith.cmpf oeq, %115, %118 : vector<8x3xf32>
      %c8_i32_43 = arith.constant 8 : i32
      %120 = vector.broadcast %c8_i32_43 : i32 to vector<8x3xi32>
      %121 = arith.select %119, %5, %120 : vector<8x3xi1>, vector<8x3xi32>
      %cst_44 = arith.constant dense<2147483647> : vector<3xi32>
      %122 = vector.multi_reduction <minsi>, %121, %cst_44 [0] : vector<8x3xi32> to vector<3xi32>
      %123 = vector.shape_cast %122 : vector<3xi32> to vector<1x3xi32>
      %124 = arith.addf %arg9, %29 : vector<8x3xf32>
      %cst_45 = arith.constant dense<0xFF800000> : vector<3xf32>
      %125 = vector.multi_reduction <maximumf>, %124, %cst_45 [0] : vector<8x3xf32> to vector<3xf32>
      %126 = vector.shape_cast %125 : vector<3xf32> to vector<1x3xf32>
      %127 = vector.broadcast %126 : vector<1x3xf32> to vector<8x3xf32>
      %128 = arith.cmpf oeq, %124, %127 : vector<8x3xf32>
      %c8_i32_46 = arith.constant 8 : i32
      %129 = vector.broadcast %c8_i32_46 : i32 to vector<8x3xi32>
      %130 = arith.select %128, %5, %129 : vector<8x3xi1>, vector<8x3xi32>
      %cst_47 = arith.constant dense<2147483647> : vector<3xi32>
      %131 = vector.multi_reduction <minsi>, %130, %cst_47 [0] : vector<8x3xi32> to vector<3xi32>
      %132 = vector.shape_cast %131 : vector<3xi32> to vector<1x3xi32>
      %133 = tpu.concatenate %63, %72, %81, %90, %99, %108, %117, %126 in 0 : vector<1x3xf32>, vector<1x3xf32>, vector<1x3xf32>, vector<1x3xf32>, vector<1x3xf32>, vector<1x3xf32>, vector<1x3xf32>, vector<1x3xf32> -> vector<8x3xf32>
      %134 = tpu.concatenate %69, %78, %87, %96, %105, %114, %123, %132 in 0 : vector<1x3xi32>, vector<1x3xi32>, vector<1x3xi32>, vector<1x3xi32>, vector<1x3xi32>, vector<1x3xi32>, vector<1x3xi32>, vector<1x3xi32> -> vector<8x3xi32>
      %135 = arith.index_cast %arg8 : i32 to index
      %c0_48 = arith.constant 0 : index
      %c0_49 = arith.constant 0 : index
      %136 = vector.load %arg7[%135, %c0_48, %c0_49] : memref<8x8x3xi32, #tpu.memory_space<vmem>>, vector<1x8x3xi32>
      %137 = vector.shape_cast %136 : vector<1x8x3xi32> to vector<8x3xi32>
      %138 = vector.shape_cast %134 : vector<8x3xi32> to vector<1x8x3xi32>
      tpu.vector_store %arg7[%135, %c0_48, %c0_49], %138 {strides = array<i32>} : memref<8x8x3xi32, #tpu.memory_space<vmem>>, vector<1x8x3xi32>,
      %139 = arith.addf %133, %60 : vector<8x3xf32>
      %140 = vector.broadcast %arg8 : i32 to vector<8x3xi32>
      %141 = arith.cmpi slt, %140, %4 : vector<8x3xi32>
      %142 = arith.select %141, %139, %arg9 : vector<8x3xi1>, vector<8x3xf32>
      scf.yield %142 : vector<8x3xf32>
    }
    %c0_11 = arith.constant 0 : index
    %c7_12 = arith.constant 7 : index
    %38 = vector.load %arg4[%c0_11, %c7_12] : memref<8x8xf32, #tpu.memory_space<vmem>>, vector<8x1xf32>
    %39 = vector.shape_cast %38 : vector<8x1xf32> to vector<8x1xf32>
    %40 = vector.broadcast %39 : vector<8x1xf32> to vector<8x3xf32>
    %41 = arith.addf %37, %40 : vector<8x3xf32>
    %cst_13 = arith.constant dense<0xFF800000> : vector<3xf32>
    %42 = vector.multi_reduction <maximumf>, %41, %cst_13 [0] : vector<8x3xf32> to vector<3xf32>
    %43 = vector.shape_cast %42 : vector<3xf32> to vector<1x3xf32>
    %44 = vector.broadcast %43 : vector<1x3xf32> to vector<8x3xf32>
    %45 = arith.cmpf oeq, %41, %44 : vector<8x3xf32>
    %c8_i32 = arith.constant 8 : i32
    %46 = vector.broadcast %c8_i32 : i32 to vector<8x3xi32>
    %47 = arith.select %45, %5, %46 : vector<8x3xi1>, vector<8x3xi32>
    %cst_14 = arith.constant dense<2147483647> : vector<3xi32>
    %48 = vector.multi_reduction <minsi>, %47, %cst_14 [0] : vector<8x3xi32> to vector<3xi32>
    %49 = vector.shape_cast %48 : vector<3xi32> to vector<1x3xi32>
    %c0_15 = arith.constant 0 : index
    %c0_16 = arith.constant 0 : index
    %50 = vector.load %arg5[%c0_15, %c0_16] : memref<1x3xf32, #tpu.memory_space<vmem>>, vector<1x3xf32>
    tpu.vector_store %arg5[%c0_15, %c0_16], %43 {strides = array<i32>} : memref<1x3xf32, #tpu.memory_space<vmem>>, vector<1x3xf32>,
    %c-1_i32 = arith.constant -1 : i32
    %51 = vector.broadcast %c-1_i32 : i32 to vector<8x3xi32>
    %c0_17 = arith.constant 0 : index
    %c0_18 = arith.constant 0 : index
    %52 = vector.load %arg6[%c0_17, %c0_18] : memref<8x3xi32, #tpu.memory_space<vmem>>, vector<8x3xi32>
    tpu.vector_store %arg6[%c0_17, %c0_18], %51 {strides = array<i32>} : memref<8x3xi32, #tpu.memory_space<vmem>>, vector<8x3xi32>,
    %c1_i32_19 = arith.constant 1 : i32
    %53 = vector.broadcast %c1_i32_19 : i32 to vector<1x3xi32>
    %54 = arith.subi %2, %53 : vector<1x3xi32>
    %c0_i32_20 = arith.constant 0 : i32
    %55 = arith.subi %1, %c0_i32_20 : i32
    %56 = arith.addi %c0_i32_20, %55 : i32
    %c1_i32_21 = arith.constant 1 : i32
    %57 = scf.for %arg8 = %c0_i32_20 to %56 step %c1_i32_21 iter_args(%arg9 = %49) -> (vector<1x3xi32>)  : i32 {
      %c1_i32_22 = arith.constant 1 : i32
      %58 = arith.subi %1, %c1_i32_22 : i32
      %59 = arith.subi %58, %arg8 : i32
      %c1_i32_23 = arith.constant 1 : i32
      %60 = arith.addi %59, %c1_i32_23 : i32
      %c7_i32 = arith.constant 7 : i32
      %61 = arith.minsi %60, %c7_i32 : i32
      %62 = arith.index_cast %61 : i32 to index
      %c0_24 = arith.constant 0 : index
      %c0_25 = arith.constant 0 : index
      %63 = vector.load %arg7[%62, %c0_24, %c0_25] : memref<8x8x3xi32, #tpu.memory_space<vmem>>, vector<1x8x3xi32>
      %64 = vector.shape_cast %63 : vector<1x8x3xi32> to vector<8x3xi32>
      %65 = vector.broadcast %arg9 : vector<1x3xi32> to vector<8x3xi32>
      %66 = arith.cmpi eq, %5, %65 : vector<8x3xi32>
      %c0_i32_26 = arith.constant 0 : i32
      %67 = vector.broadcast %c0_i32_26 : i32 to vector<8x3xi32>
      %68 = arith.select %66, %64, %67 : vector<8x3xi1>, vector<8x3xi32>
      %cst_27 = arith.constant dense<0> : vector<3xi32>
      %69 = vector.multi_reduction <add>, %68, %cst_27 [0] : vector<8x3xi32> to vector<3xi32>
      %70 = vector.shape_cast %69 : vector<3xi32> to vector<1x3xi32>
      %71 = vector.broadcast %59 : i32 to vector<1x3xi32>
      %72 = arith.cmpi eq, %71, %54 : vector<1x3xi32>
      %73 = vector.broadcast %59 : i32 to vector<1x3xi32>
      %74 = arith.cmpi slt, %73, %54 : vector<1x3xi32>
      %c-1_i32_28 = arith.constant -1 : i32
      %75 = vector.broadcast %c-1_i32_28 : i32 to vector<1x3xi32>
      %76 = arith.select %74, %70, %75 : vector<1x3xi1>, vector<1x3xi32>
      %77 = arith.select %72, %49, %76 : vector<1x3xi1>, vector<1x3xi32>
      %78 = arith.index_cast %59 : i32 to index
      %c0_29 = arith.constant 0 : index
      %79 = vector.load %arg6[%78, %c0_29] : memref<8x3xi32, #tpu.memory_space<vmem>>, vector<1x3xi32>
      tpu.vector_store %arg6[%78, %c0_29], %77 {strides = array<i32>} : memref<8x3xi32, #tpu.memory_space<vmem>>, vector<1x3xi32>,
      %80 = vector.broadcast %59 : i32 to vector<1x3xi32>
      %81 = arith.cmpi sle, %80, %54 : vector<1x3xi32>
      %82 = arith.select %81, %77, %arg9 : vector<1x3xi1>, vector<1x3xi32>
      scf.yield %82 : vector<1x3xi32>
    }
    return
  }
  func.func @transform_0(%arg0: i32, %arg1: memref<1xi32, #tpu.memory_space<smem>>) -> (i32, i32) {
    %c0_i32 = arith.constant 0 : i32
    %c0_i32_0 = arith.constant 0 : i32
    return %c0_i32, %arg0 : i32, i32
  }
  func.func @transform_1(%arg0: i32, %arg1: memref<1xi32, #tpu.memory_space<smem>>) -> (i32, i32, i32) {
    %c0_i32 = arith.constant 0 : i32
    %c0_i32_0 = arith.constant 0 : i32
    %c0_i32_1 = arith.constant 0 : i32
    return %c0_i32, %c0_i32_0, %arg0 : i32, i32, i32
  }
  func.func @transform_2(%arg0: i32, %arg1: memref<1xi32, #tpu.memory_space<smem>>) -> (i32, i32) {
    %c0_i32 = arith.constant 0 : i32
    %c0_i32_0 = arith.constant 0 : i32
    %c0_i32_1 = arith.constant 0 : i32
    return %c0_i32, %c0_i32_0 : i32, i32
  }
  func.func @transform_3(%arg0: i32, %arg1: memref<1xi32, #tpu.memory_space<smem>>) -> (i32, i32) {
    %c0_i32 = arith.constant 0 : i32
    %c0_i32_0 = arith.constant 0 : i32
    return %c0_i32, %arg0 : i32, i32
  }
  func.func @transform_4(%arg0: i32, %arg1: memref<1xi32, #tpu.memory_space<smem>>) -> (i32, i32) {
    %c0_i32 = arith.constant 0 : i32
    %c0_i32_0 = arith.constant 0 : i32
    return %c0_i32, %arg0 : i32, i32
  }
}

</mosaic_0001>

<llo_original>
// kernel: crf_viterbi_forward.1
$region0: #{crf_viterbi_forward.1}
  #allocation0 [shape = 'u32[]', space=smem, size = 0x4, offset = 0x4, fixed_abs, tag = 'smem constant byte address 0x4 - core index']
  #allocation1 [shape = 'u32[144,128]{1,0:T(1,128)}', space=vmem, size = 0x12000, scoped, tag = 'internal scratch']
  #allocation2 [shape = 's32[8,8,3]{2,1,0:T(8,128)}', space=vmem, size = 0x8000, scoped, tag = 'scratch operand']
  #allocation3 [shape = 's32[1]{0}', space=sflag, size = 0x4, scoped, tag = 'scoped memory for crf_viterbi_forward.1']
  #allocation4 [shape = 's32[1]{0:T(128)S(6)}', space=smem, size = 0x200, scoped, tag = 'prefetched SMEM operand 0']
  %s0 = inlined_call_operand.<no memory space> [shape: s32[1], index: 0, kind: input, shape index: {}]
  %s1 = inlined_call_operand.vmem [shape: s32[1,3], index: 1, kind: input, shape index: {}]
  %s2 = inlined_call_operand.vmem [shape: f32[8,8,3], index: 2, kind: input, shape index: {}]
  %s3 = inlined_call_operand.vmem [shape: f32[8,8], index: 3, kind: input, shape index: {}]
  %s4 = inlined_call_operand.hbm [shape: f32[1,3], index: 4, kind: output, shape index: {0}]
  %s5 = inlined_call_operand.vmem [shape: s32[8,3], index: 5, kind: output, shape index: {1}]
  %6 = xla_tuple %s4, %s5
  %s7 = sld [smem:[#allocation0]]
  $region44: #{crf_viterbi_forward.1} parent=0
    _
  %s9 = ssub.s32 1, %s7
  %s10 = scalar_select 0, %s9, %s7
  %11 = sst [smem:[#allocation4]] %s0
  $region1: #{crf_viterbi_forward.1} parent=0
    #allocation5 [shape = 'u8[512]{0}', space=vmem, size = 0x400, scoped, tag = 'output window, operand 0, single buffered']
    #allocation6 [shape = 's32[1]{0}', space=sflag, size = 0x4, scoped, tag = 'scoped memory for crf_viterbi_forward.1']
    %12 = vsyncpa [#allocation6], 0
    // Predicated region
    $region2: #{crf_viterbi_forward.1} parent=1 // pred_check
      _
    $region3: #{crf_viterbi_forward.1} parent=1 // pred_check_branch
      %14 = sbr.rel (0) target = $region5
    $region4: #{crf_viterbi_forward.1} parent=1 // pred_region
      _
    $region5: #{crf_viterbi_forward.1} parent=1 // pred_fallthru
      _
    // Predicated region
    $region6: #{crf_viterbi_forward.1} parent=1 // pred_check
      _
    $region7: #{crf_viterbi_forward.1} parent=1 // pred_check_branch
      %16 = sbr.rel (0) target = $region9
    $region8: #{crf_viterbi_forward.1} parent=1 // pred_region
      _
    $region9: #{crf_viterbi_forward.1} parent=1 // pred_fallthru
      _
    // Predicated region
    $region10: #{crf_viterbi_forward.1} parent=1 // pred_check
      _
    $region11: #{crf_viterbi_forward.1} parent=1 // pred_check_branch
      %18 = sbr.rel (0) target = $region13
    $region12: #{crf_viterbi_forward.1} parent=1 // pred_region
      _
    $region13: #{crf_viterbi_forward.1} parent=1 // pred_fallthru
      _
    %s19 = sld [smem:[#allocation4]]
    %v20 = vld [vmem:[%s1] sm:$0x1]
    %v21 = vlaneseq
    %v22 = vshrl.u32 %v21, 7
    %v23 = vsub.s32 0, %v22
    %v24 = vrot.slane %v20, %v23
    %v25 = vlaneseq
    %v26 = vshrl.u32 %v25, 7
    %v27 = vld [vmem:[%s3] sm:$0xff]
    %29 = vset.pattern.permute.xlu0 0
    %30 = vperm.xlu0 %29, %v27
    %v31 = vpop.permute.xlu0 %30
    %33 = vset.pattern.permute.xlu0 1
    %34 = vperm.xlu0 %33, %v27
    %v35 = vpop.permute.xlu0 %34
    %37 = vset.pattern.permute.xlu0 2
    %38 = vperm.xlu0 %37, %v27
    %v39 = vpop.permute.xlu0 %38
    %41 = vset.pattern.permute.xlu0 3
    %42 = vperm.xlu0 %41, %v27
    %v43 = vpop.permute.xlu0 %42
    %45 = vset.pattern.permute.xlu0 4
    %46 = vperm.xlu0 %45, %v27
    %v47 = vpop.permute.xlu0 %46
    %49 = vset.pattern.permute.xlu0 5
    %50 = vperm.xlu0 %49, %v27
    %v51 = vpop.permute.xlu0 %50
    %53 = vset.pattern.permute.xlu0 6
    %54 = vperm.xlu0 %53, %v27
    %v55 = vpop.permute.xlu0 %54
    %57 = vset.pattern.permute.xlu0 7
    %58 = vperm.xlu0 %57, %v27
    %v59 = vpop.permute.xlu0 %58
    %vm61 = vcmp.eq.s32.totalorder %v26, 6
    %v62 = vsel %vm61, 0.0, -10000.0
    // While loop
    $region14: #{crf_viterbi_forward.1} parent=1 // loop_pre_header
      _
    $region15: #{crf_viterbi_forward.1} parent=1 // loop_header
      %s64 = sphi 0, %s66
      %p65 = scmp.ge.s32.totalorder %s64, %s19
      %v69 = vphi %v62, %v260
    $region16: #{crf_viterbi_forward.1} parent=1 // loop_header_branch
      %68 = sbr.rel (%p65) target = $region20
    $region17: #{crf_viterbi_forward.1} parent=1 // loop_body
      %s70 = smul.u32 %s64, 8
      %s71 = scalar_lea.vmem %s2, %s70
      %v72 = vld [vmem:[%s71] sm:$0xff]
      %v73 = vadd.f32 %v69, %v31
      %vm74 = vcmask 23552
      %v75 = vsel %vm74, %v73, -inf
      %v76 = vrot.slane %v75, 4
      %v77 = vmax.f32 %v75, %v76
      %v78 = vrot.slane %v77, 2
      %v79 = vmax.f32 %v77, %v78
      %v80 = vrot.slane %v79, 1
      %v81 = vmax.f32 %v79, %v80
      %vm82 = vcmp.eq.f32.partialorder %v73, %v81
      %v83 = vsel %vm82, %v26, 8
      %v84 = vsel %vm74, %v83, 2147483647
      %v85 = vrot.slane %v84, 4
      %vm86 = vcmp.lt.s32.totalorder %v84, %v85
      %v87 = vsel %vm86, %v84, %v85
      %v88 = vrot.slane %v87, 2
      %vm89 = vcmp.lt.s32.totalorder %v87, %v88
      %v90 = vsel %vm89, %v87, %v88
      %v91 = vrot.slane %v90, 1
      %vm92 = vcmp.lt.s32.totalorder %v90, %v91
      %v93 = vsel %vm92, %v90, %v91
      %v94 = vadd.f32 %v69, %v35
      %v95 = vsel %vm74, %v94, -inf
      %v96 = vrot.slane %v95, 4
      %v97 = vmax.f32 %v95, %v96
      %v98 = vrot.slane %v97, 2
      %v99 = vmax.f32 %v97, %v98
      %v100 = vrot.slane %v99, 1
      %v101 = vmax.f32 %v99, %v100
      %vm102 = vcmp.eq.f32.partialorder %v94, %v101
      %v103 = vsel %vm102, %v26, 8
      %v104 = vsel %vm74, %v103, 2147483647
      %v105 = vrot.slane %v104, 4
      %vm106 = vcmp.lt.s32.totalorder %v104, %v105
      %v107 = vsel %vm106, %v104, %v105
      %v108 = vrot.slane %v107, 2
      %vm109 = vcmp.lt.s32.totalorder %v107, %v108
      %v110 = vsel %vm109, %v107, %v108
      %v111 = vrot.slane %v110, 1
      %vm112 = vcmp.lt.s32.totalorder %v110, %v111
      %v113 = vsel %vm112, %v110, %v111
      %v114 = vadd.f32 %v69, %v39
      %v115 = vsel %vm74, %v114, -inf
      %v116 = vrot.slane %v115, 4
      %v117 = vmax.f32 %v115, %v116
      %v118 = vrot.slane %v117, 2
      %v119 = vmax.f32 %v117, %v118
      %v120 = vrot.slane %v119, 1
      %v121 = vmax.f32 %v119, %v120
      %vm122 = vcmp.eq.f32.partialorder %v114, %v121
      %v123 = vsel %vm122, %v26, 8
      %v124 = vsel %vm74, %v123, 2147483647
      %v125 = vrot.slane %v124, 4
      %vm126 = vcmp.lt.s32.totalorder %v124, %v125
      %v127 = vsel %vm126, %v124, %v125
      %v128 = vrot.slane %v127, 2
      %vm129 = vcmp.lt.s32.totalorder %v127, %v128
      %v130 = vsel %vm129, %v127, %v128
      %v131 = vrot.slane %v130, 1
      %vm132 = vcmp.lt.s32.totalorder %v130, %v131
      %v133 = vsel %vm132, %v130, %v131
      %v134 = vadd.f32 %v69, %v43
      %v135 = vsel %vm74, %v134, -inf
      %v136 = vrot.slane %v135, 4
      %v137 = vmax.f32 %v135, %v136
      %v138 = vrot.slane %v137, 2
      %v139 = vmax.f32 %v137, %v138
      %v140 = vrot.slane %v139, 1
      %v141 = vmax.f32 %v139, %v140
      %vm142 = vcmp.eq.f32.partialorder %v134, %v141
      %v143 = vsel %vm142, %v26, 8
      %v144 = vsel %vm74, %v143, 2147483647
      %v145 = vrot.slane %v144, 4
      %vm146 = vcmp.lt.s32.totalorder %v144, %v145
      %v147 = vsel %vm146, %v144, %v145
      %v148 = vrot.slane %v147, 2
      %vm149 = vcmp.lt.s32.totalorder %v147, %v148
      %v150 = vsel %vm149, %v147, %v148
      %v151 = vrot.slane %v150, 1
      %vm152 = vcmp.lt.s32.totalorder %v150, %v151
      %v153 = vsel %vm152, %v150, %v151
      %v154 = vadd.f32 %v69, %v47
      %v155 = vsel %vm74, %v154, -inf
      %v156 = vrot.slane %v155, 4
      %v157 = vmax.f32 %v155, %v156
      %v158 = vrot.slane %v157, 2
      %v159 = vmax.f32 %v157, %v158
      %v160 = vrot.slane %v159, 1
      %v161 = vmax.f32 %v159, %v160
      %vm162 = vcmp.eq.f32.partialorder %v154, %v161
      %v163 = vsel %vm162, %v26, 8
      %v164 = vsel %vm74, %v163, 2147483647
      %v165 = vrot.slane %v164, 4
      %vm166 = vcmp.lt.s32.totalorder %v164, %v165
      %v167 = vsel %vm166, %v164, %v165
      %v168 = vrot.slane %v167, 2
      %vm169 = vcmp.lt.s32.totalorder %v167, %v168
      %v170 = vsel %vm169, %v167, %v168
      %v171 = vrot.slane %v170, 1
      %vm172 = vcmp.lt.s32.totalorder %v170, %v171
      %v173 = vsel %vm172, %v170, %v171
      %v174 = vadd.f32 %v69, %v51
      %v175 = vsel %vm74, %v174, -inf
      %v176 = vrot.slane %v175, 4
      %v177 = vmax.f32 %v175, %v176
      %v178 = vrot.slane %v177, 2
      %v179 = vmax.f32 %v177, %v178
      %v180 = vrot.slane %v179, 1
      %v181 = vmax.f32 %v179, %v180
      %vm182 = vcmp.eq.f32.partialorder %v174, %v181
      %v183 = vsel %vm182, %v26, 8
      %v184 = vsel %vm74, %v183, 2147483647
      %v185 = vrot.slane %v184, 4
      %vm186 = vcmp.lt.s32.totalorder %v184, %v185
      %v187 = vsel %vm186, %v184, %v185
      %v188 = vrot.slane %v187, 2
      %vm189 = vcmp.lt.s32.totalorder %v187, %v188
      %v190 = vsel %vm189, %v187, %v188
      %v191 = vrot.slane %v190, 1
      %vm192 = vcmp.lt.s32.totalorder %v190, %v191
      %v193 = vsel %vm192, %v190, %v191
      %v194 = vadd.f32 %v69, %v55
      %v195 = vsel %vm74, %v194, -inf
      %v196 = vrot.slane %v195, 4
      %v197 = vmax.f32 %v195, %v196
      %v198 = vrot.slane %v197, 2
      %v199 = vmax.f32 %v197, %v198
      %v200 = vrot.slane %v199, 1
      %v201 = vmax.f32 %v199, %v200
      %vm202 = vcmp.eq.f32.partialorder %v194, %v201
      %v203 = vsel %vm202, %v26, 8
      %v204 = vsel %vm74, %v203, 2147483647
      %v205 = vrot.slane %v204, 4
      %vm206 = vcmp.lt.s32.totalorder %v204, %v205
      %v207 = vsel %vm206, %v204, %v205
      %v208 = vrot.slane %v207, 2
      %vm209 = vcmp.lt.s32.totalorder %v207, %v208
      %v210 = vsel %vm209, %v207, %v208
      %v211 = vrot.slane %v210, 1
      %vm212 = vcmp.lt.s32.totalorder %v210, %v211
      %v213 = vsel %vm212, %v210, %v211
      %v214 = vadd.f32 %v69, %v59
      %v215 = vsel %vm74, %v214, -inf
      %v216 = vrot.slane %v215, 4
      %v217 = vmax.f32 %v215, %v216
      %v218 = vrot.slane %v217, 2
      %v219 = vmax.f32 %v217, %v218
      %v220 = vrot.slane %v219, 1
      %v221 = vmax.f32 %v219, %v220
      %vm222 = vcmp.eq.f32.partialorder %v214, %v221
      %v223 = vsel %vm222, %v26, 8
      %v224 = vsel %vm74, %v223, 2147483647
      %v225 = vrot.slane %v224, 4
      %vm226 = vcmp.lt.s32.totalorder %v224, %v225
      %v227 = vsel %vm226, %v224, %v225
      %v228 = vrot.slane %v227, 2
      %vm229 = vcmp.lt.s32.totalorder %v227, %v228
      %v230 = vsel %vm229, %v227, %v228
      %v231 = vrot.slane %v230, 1
      %vm232 = vcmp.lt.s32.totalorder %v230, %v231
      %v233 = vsel %vm232, %v230, %v231
      %vm234 = vcmask 1040384
      %v235 = vsel %vm234, %v81, %v101
      %vm236 = vcmask 1041408
      %v237 = vsel %vm236, %v235, %v121
      %vm238 = vcmask 1042432
      %v239 = vsel %vm238, %v237, %v141
      %vm240 = vcmask 1043456
      %v241 = vsel %vm240, %v239, %v161
      %vm242 = vcmask 1044480
      %v243 = vsel %vm242, %v241, %v181
      %vm244 = vcmask 1045504
      %v245 = vsel %vm244, %v243, %v201
      %vm246 = vcmask 1046528
      %v247 = vsel %vm246, %v245, %v221
      %v248 = vsel %vm234, %v93, %v113
      %v249 = vsel %vm236, %v248, %v133
      %v250 = vsel %vm238, %v249, %v153
      %v251 = vsel %vm240, %v250, %v173
      %v252 = vsel %vm242, %v251, %v193
      %v253 = vsel %vm244, %v252, %v213
      %v254 = vsel %vm246, %v253, %v233
      %s255 = scalar_lea.vmem [#allocation2], %s70
      %256 = vst.msk [vmem:[%s255] sm:$0xff] %vm74, %v254
      %v257 = vadd.f32 %v247, %v72
      %v258 = vstv %s64
      %vm259 = vcmp.lt.s32.totalorder %v258, %v24
      %v260 = vsel %vm259, %v257, %v69
    $region18: #{crf_viterbi_forward.1} parent=1 // loop_footer
      %s66 = sadd.s32 %s64, 1
    $region19: #{crf_viterbi_forward.1} parent=1 // loop_footer_branch
      %63 = sbr.rel target = $region15
    $region20: #{crf_viterbi_forward.1} parent=1 // loop_exit
      _
    %v261 = vld [vmem:[%s3] sm:$0xff]
    %263 = vset.pattern.permute.xlu0 7
    %264 = vperm.xlu0 %263, %v261
    %v265 = vpop.permute.xlu0 %264
    %v267 = vadd.f32 %v69, %v265
    %vm268 = vcmask 23552
    %v269 = vsel %vm268, %v267, -inf
    %v270 = vrot.slane %v269, 4
    %v271 = vmax.f32 %v269, %v270
    %v272 = vrot.slane %v271, 2
    %v273 = vmax.f32 %v271, %v272
    %v274 = vrot.slane %v273, 1
    %v275 = vmax.f32 %v273, %v274
    %vm276 = vcmp.eq.f32.partialorder %v267, %v275
    %v277 = vsel %vm276, %v26, 8
    %v278 = vsel %vm268, %v277, 2147483647
    %v279 = vrot.slane %v278, 4
    %vm280 = vcmp.lt.s32.totalorder %v278, %v279
    %v281 = vsel %vm280, %v278, %v279
    %v282 = vrot.slane %v281, 2
    %vm283 = vcmp.lt.s32.totalorder %v281, %v282
    %v284 = vsel %vm283, %v281, %v282
    %v285 = vrot.slane %v284, 1
    %vm286 = vcmp.lt.s32.totalorder %v284, %v285
    %v287 = vsel %vm286, %v284, %v285
    %vm288 = vcmask 16384
    %289 = vst.msk [vmem:[#allocation5] sm:$0x1] %vm288, %v275
    %290 = vst.msk [vmem:[%s5] sm:$0xff] %vm268, 4294967295
    %v291 = vsub.s32 %v20, 1
    // While loop
    $region21: #{crf_viterbi_forward.1} parent=1 // loop_pre_header
      _
    $region22: #{crf_viterbi_forward.1} parent=1 // loop_header
      %s293 = sphi 0, %s295
      %p294 = scmp.ge.s32.totalorder %s293, %s19
      %v298 = vphi %v287, %v328
    $region23: #{crf_viterbi_forward.1} parent=1 // loop_header_branch
      %297 = sbr.rel (%p294) target = $region27
    $region24: #{crf_viterbi_forward.1} parent=1 // loop_body
      %s299 = ssub.s32 %s19, 1
      %s300 = ssub.s32 %s299, %s293
      %s301 = sadd.s32 %s300, 1
      %p302 = scmp.lt.s32.totalorder %s301, 7
      %s303 = scalar_select %p302, %s301, 7
      %s304 = smul.u32 %s303, 8
      %s305 = scalar_lea.vmem [#allocation2], %s304
      %v306 = vld [vmem:[%s305] sm:$0xff]
      %v307 = vlaneseq
      %v308 = vshrl.u32 %v307, 7
      %v309 = vsub.s32 0, %v308
      %v310 = vrot.slane %v298, %v309
      %vm311 = vcmp.eq.s32.totalorder %v26, %v310
      %v312 = vsel %vm311, %v306, 0
      %v313 = vsel %vm268, %v312, 0
      %v314 = vrot.slane %v313, 4
      %v315 = vadd.s32 %v313, %v314
      %v316 = vrot.slane %v315, 2
      %v317 = vadd.s32 %v315, %v316
      %v318 = vrot.slane %v317, 1
      %v319 = vadd.s32 %v317, %v318
      %v320 = vstv %s300
      %vm321 = vcmp.eq.s32.totalorder %v320, %v291
      %vm322 = vcmp.lt.s32.totalorder %v320, %v291
      %v323 = vsel %vm322, %v319, 4294967295
      %v324 = vsel %vm321, %v287, %v323
      %s325 = scalar_lea.vmem %s5, %s300
      %326 = vst.msk [vmem:[%s325] sm:$0x1] %vm288, %v324
      %vm327 = vcmp.le.s32.totalorder %v320, %v291
      %v328 = vsel %vm327, %v324, %v298
    $region25: #{crf_viterbi_forward.1} parent=1 // loop_footer
      %s295 = sadd.s32 %s293, 1
    $region26: #{crf_viterbi_forward.1} parent=1 // loop_footer_branch
      %292 = sbr.rel target = $region22
    $region27: #{crf_viterbi_forward.1} parent=1 // loop_exit
      _
    // Predicated region
    $region28: #{crf_viterbi_forward.1} parent=1 // pred_check
      _
    $region29: #{crf_viterbi_forward.1} parent=1 // pred_check_branch
      %330 = sbr.rel (0) target = $region31
    $region30: #{crf_viterbi_forward.1} parent=1 // pred_region
      %s332 = ssub.s32 16, 16
      %333 = vsyncadd [#allocation6], %s332
      %s335 = sshll.u32 [#allocation5], 4
      %s336 = int_to_ptr.vmem [resolvable:$true] %s335
      %338 = dma.vmem_to_hbm [thread:$0]  %s336, 16, %s4, [#allocation6]
    $region31: #{crf_viterbi_forward.1} parent=1 // pred_fallthru
      _
    // Predicated region
    $region32: #{crf_viterbi_forward.1} parent=1 // pred_check
      _
    $region33: #{crf_viterbi_forward.1} parent=1 // pred_check_branch
      %340 = sbr.rel (0) target = $region35
    $region34: #{crf_viterbi_forward.1} parent=1 // pred_region
      _
    $region35: #{crf_viterbi_forward.1} parent=1 // pred_fallthru
      _
    // Predicated region
    $region36: #{crf_viterbi_forward.1} parent=1 // pred_check
      _
    $region37: #{crf_viterbi_forward.1} parent=1 // pred_check_branch
      %342 = sbr.rel (0) target = $region39
    $region38: #{crf_viterbi_forward.1} parent=1 // pred_region
      %343 = dma.done [#allocation6], 16
    $region39: #{crf_viterbi_forward.1} parent=1 // pred_fallthru
      _
    // Predicated region
    $region40: #{crf_viterbi_forward.1} parent=1 // pred_check
      _
    $region41: #{crf_viterbi_forward.1} parent=1 // pred_check_branch
      %345 = sbr.rel (0) target = $region43
    $region42: #{crf_viterbi_forward.1} parent=1 // pred_region
      _
    $region43: #{crf_viterbi_forward.1} parent=1 // pred_fallthru
      _
    %346 = vsyncpa [#allocation6], 1

</llo_original>
